<compile_context>
chip_gen: v5e
topology: v5e:2x2
jax: 0.10.0
libtpu: 0.0.40
codegen_flags: <defaults>
</compile_context>

<pallas_src>
import jax
import jax.numpy as jnp
from jax.experimental import pallas as pl
from jax.experimental.pallas import tpu as pltpu


def _round_up(n, m):
    return ((n + m - 1) // m) * m


def xor_mlp_kernel(params_ref, x_ref, o_ref):
    # params_ref: SMEM (9,) f32 = [w1_00, w1_01, w1_10, w1_11, b1_0, b1_1, w2_00, w2_01, b2_0]
    #             (PyTorch Linear convention: weight stored (out, in)).
    # x_ref: VMEM (2, r_tile, 128) -- x_ref[f] is a fully dense (sublane x lane) slab of feature f.
    # o_ref: VMEM (r_tile, 128)    -- dense output slab, unmasked stores.
    # Hoist the 9 scalar reads (scalar slot) ahead of the vector work.
    w1_00 = params_ref[0]
    w1_01 = params_ref[1]
    w1_10 = params_ref[2]
    w1_11 = params_ref[3]
    b1_0 = params_ref[4]
    b1_1 = params_ref[5]
    w2_00 = params_ref[6]
    w2_01 = params_ref[7]
    b2_0 = params_ref[8]

    x0 = x_ref[0].astype(jnp.float32)  # (r_tile, 128)
    x1 = x_ref[1].astype(jnp.float32)  # (r_tile, 128)

    # Hidden layer: h_j = tanh(w1[j,0]*x0 + w1[j,1]*x1 + b1[j])  (VPU FMAs + EUP tanh).
    h0 = jnp.tanh(w1_00 * x0 + w1_01 * x1 + b1_0)
    h1 = jnp.tanh(w1_10 * x0 + w1_11 * x1 + b1_1)

    # Output layer: sigmoid(z) computed as 0.5*tanh(0.5*z)+0.5 (one EUP push, not exp+divide).
    z = w2_00 * h0 + w2_01 * h1 + b2_0
    o_ref[...] = (0.5 * jnp.tanh(0.5 * z) + 0.5).astype(o_ref.dtype)


def xor_mlp(x, w1, b1, w2, b2, *, max_rows_per_step=2048, feature_major=False):
    """Forward pass of MyModel.

    x : (B, 2) float32/bfloat16 (or (2, B) if feature_major=True, which skips the
        wrapper-side transpose copy).
    w1: (2, 2) = Linear(2, 2).weight, b1: (2,), w2: (1, 2) = Linear(2, 1).weight, b2: (1,)
    Returns (B, 1) in x's dtype.
    """
    x = jnp.asarray(x)
    if x.dtype not in (jnp.float32, jnp.bfloat16):
        x = x.astype(jnp.float32)
    B = x.shape[1] if feature_major else x.shape[0]

    # Batch layout: 128 lanes x r_tile sublane-rows per grid step (fully dense vregs).
    r_needed = max(1, pl.cdiv(B, 128))
    num_tiles = pl.cdiv(r_needed, max_rows_per_step)
    if num_tiles > 1 and num_tiles % 2 == 1:
        num_tiles += 1  # even tile count -> balanced across v7x's two TensorCores
    r_tile = _round_up(pl.cdiv(r_needed, num_tiles), 16)  # mult. of 16: safe for f32 & bf16
    Rp = num_tiles * r_tile
    Bp = Rp * 128

    if feature_major:
        xt = jnp.pad(x, ((0, 0), (0, Bp - B)))            # (2, Bp), no transpose needed
    else:
        # Pad + transpose fuse into a single XLA copy; pass feature-major data upstream
        # to avoid this extra HBM pass for very large batches.
        xt = jnp.pad(x, ((0, Bp - B), (0, 0))).T          # (2, Bp)
    xt = xt.reshape(2, Rp, 128)                           # free reshape: batch fills sublanes+lanes

    # Pack the 9 parameters into one flat f32 vector for SMEM.
    params = jnp.concatenate([
        jnp.asarray(w1, jnp.float32).reshape(-1),  # [w1_00, w1_01, w1_10, w1_11]
        jnp.asarray(b1, jnp.float32).reshape(-1),  # [b1_0, b1_1]
        jnp.asarray(w2, jnp.float32).reshape(-1),  # [w2_00, w2_01]
        jnp.asarray(b2, jnp.float32).reshape(-1),  # [b2_0]
    ])

    itemsize = jnp.dtype(x.dtype).itemsize
    cost = pl.CostEstimate(
        flops=15 * Bp,
        transcendentals=3 * Bp,
        bytes_accessed=3 * itemsize * Bp + 9 * 4,
    )

    out_slab = pl.pallas_call(
        xor_mlp_kernel,
        out_shape=jax.ShapeDtypeStruct((Rp, 128), x.dtype),
        grid=(num_tiles,),
        in_specs=[
            pl.BlockSpec(memory_space=pltpu.MemorySpace.SMEM),    # 9 params, whole array in SMEM
            pl.BlockSpec((2, r_tile, 128), lambda i: (0, i, 0)),  # feature-major dense batch tile
        ],
        out_specs=pl.BlockSpec((r_tile, 128), lambda i: (i, 0)),  # dense (sublane x lane) output
        compiler_params=pltpu.CompilerParams(
            dimension_semantics=("parallel",),            # megacore sharding on v7x
            vmem_limit_bytes=32 * 1024 * 1024,            # covers v5e's 16 MiB default limit
        ),
        cost_estimate=cost,
    )(params, xt)

    # Back to PyTorch layout (B, 1), dropping batch padding (row-major flatten is free).
    return out_slab.reshape(-1)[:B].reshape(B, 1)


def _ref_forward(x, w1, b1, w2, b2):
    # Pure-JAX reference of MyModel.forward.
    return jax.nn.sigmoid(jnp.tanh(x @ w1.T + b1) @ w2.T + b2)


if __name__ == "__main__":
    key = jax.random.PRNGKey(0)
    k1, k2, k3, k4, k5 = jax.random.split(key, 5)

    # Deterministic parameter init (shapes from MyModel.__init__):
    #   in_hid  = Linear(2, 2): weight (2, 2), bias (2,)
    #   out_hid = Linear(2, 1): weight (1, 2), bias (1,)
    w1 = jax.random.uniform(k1, (2, 2), jnp.float32, -0.7, 0.7)
    b1 = jax.random.uniform(k2, (2,), jnp.float32, -0.7, 0.7)
    w2 = jax.random.uniform(k3, (1, 2), jnp.float32, -0.7, 0.7)
    b2 = jax.random.uniform(k4, (1,), jnp.float32, -0.7, 0.7)

    # 1) XOR truth-table input, same as the PyTorch script (B = 4): single grid step.
    x_xor = jnp.array([[0.0, 0.0], [0.0, 1.0], [1.0, 0.0], [1.0, 1.0]], dtype=jnp.float32)
    out = jax.block_until_ready(xor_mlp(x_xor, w1, b1, w2, b2))
    ref = _ref_forward(x_xor, w1, b1, w2, b2)
    assert out.shape == (4, 1)
    assert jnp.allclose(out, ref, atol=2e-5), (out, ref)

    # 2) Larger batch, still one grid step with the default tile.
    x_big = jax.random.uniform(k5, (3000, 2), jnp.float32, 0.0, 1.0)
    ref_big = _ref_forward(x_big, w1, b1, w2, b2)
    out_big = jax.block_until_ready(xor_mlp(x_big, w1, b1, w2, b2))
    assert out_big.shape == (3000, 1)
    assert jnp.allclose(out_big, ref_big, atol=2e-5)

    # 3) Force a multi-tile grid (even tile count) and the feature-major fast path.
    out_tiled = jax.block_until_ready(xor_mlp(x_big, w1, b1, w2, b2, max_rows_per_step=8))
    assert jnp.allclose(out_tiled, ref_big, atol=2e-5)
    out_fm = jax.block_until_ready(xor_mlp(x_big.T, w1, b1, w2, b2, feature_major=True))
    assert jnp.allclose(out_fm, ref_big, atol=2e-5)

    print("KERNEL_OK")
</pallas_src>

<mosaic_0001>
module attributes {stable_mosaic.version = 11 : i64} {
  func.func @xor_mlp_kernel(%arg0: i32, %arg1: memref<9xf32, #tpu.memory_space<smem>>, %arg2: memref<2x16x128xf32, #tpu.memory_space<vmem>>, %arg3: memref<16x128xf32, #tpu.memory_space<vmem>>) attributes {dimension_semantics = [#tpu.dimension_semantics<parallel>], iteration_bounds = array<i64: 1>, scalar_prefetch = 0 : i64, scratch_operands = 0 : i64, tpu.core_type = #tpu.core_type<tc>, window_params = [{transform_indices = @transform_0, window_bounds = array<i64: 9>}, {transform_indices = @transform_1, window_bounds = array<i64: 2, 16, 128>}, {transform_indices = @transform_2, window_bounds = array<i64: 16, 128>}]} {
    %c0 = arith.constant 0 : index
    %0 = memref.load %arg1[%c0] : memref<9xf32, #tpu.memory_space<smem>>
    %c1 = arith.constant 1 : index
    %1 = memref.load %arg1[%c1] : memref<9xf32, #tpu.memory_space<smem>>
    %c2 = arith.constant 2 : index
    %2 = memref.load %arg1[%c2] : memref<9xf32, #tpu.memory_space<smem>>
    %c3 = arith.constant 3 : index
    %3 = memref.load %arg1[%c3] : memref<9xf32, #tpu.memory_space<smem>>
    %c4 = arith.constant 4 : index
    %4 = memref.load %arg1[%c4] : memref<9xf32, #tpu.memory_space<smem>>
    %c5 = arith.constant 5 : index
    %5 = memref.load %arg1[%c5] : memref<9xf32, #tpu.memory_space<smem>>
    %c6 = arith.constant 6 : index
    %6 = memref.load %arg1[%c6] : memref<9xf32, #tpu.memory_space<smem>>
    %c7 = arith.constant 7 : index
    %7 = memref.load %arg1[%c7] : memref<9xf32, #tpu.memory_space<smem>>
    %c8 = arith.constant 8 : index
    %8 = memref.load %arg1[%c8] : memref<9xf32, #tpu.memory_space<smem>>
    %c0_0 = arith.constant 0 : index
    %c0_1 = arith.constant 0 : index
    %c0_2 = arith.constant 0 : index
    %9 = vector.load %arg2[%c0_0, %c0_1, %c0_2] : memref<2x16x128xf32, #tpu.memory_space<vmem>>, vector<1x16x128xf32>
    %10 = vector.shape_cast %9 : vector<1x16x128xf32> to vector<16x128xf32>
    %c1_3 = arith.constant 1 : index
    %c0_4 = arith.constant 0 : index
    %c0_5 = arith.constant 0 : index
    %11 = vector.load %arg2[%c1_3, %c0_4, %c0_5] : memref<2x16x128xf32, #tpu.memory_space<vmem>>, vector<1x16x128xf32>
    %12 = vector.shape_cast %11 : vector<1x16x128xf32> to vector<16x128xf32>
    %13 = vector.broadcast %0 : f32 to vector<16x128xf32>
    %14 = arith.mulf %13, %10 : vector<16x128xf32>
    %15 = vector.broadcast %1 : f32 to vector<16x128xf32>
    %16 = arith.mulf %15, %12 : vector<16x128xf32>
    %17 = arith.addf %14, %16 : vector<16x128xf32>
    %18 = vector.broadcast %4 : f32 to vector<16x128xf32>
    %19 = arith.addf %17, %18 : vector<16x128xf32>
    %20 = math.tanh %19 : vector<16x128xf32>
    %21 = vector.broadcast %2 : f32 to vector<16x128xf32>
    %22 = arith.mulf %21, %10 : vector<16x128xf32>
    %23 = vector.broadcast %3 : f32 to vector<16x128xf32>
    %24 = arith.mulf %23, %12 : vector<16x128xf32>
    %25 = arith.addf %22, %24 : vector<16x128xf32>
    %26 = vector.broadcast %5 : f32 to vector<16x128xf32>
    %27 = arith.addf %25, %26 : vector<16x128xf32>
    %28 = math.tanh %27 : vector<16x128xf32>
    %29 = vector.broadcast %6 : f32 to vector<16x128xf32>
    %30 = arith.mulf %29, %20 : vector<16x128xf32>
    %31 = vector.broadcast %7 : f32 to vector<16x128xf32>
    %32 = arith.mulf %31, %28 : vector<16x128xf32>
    %33 = arith.addf %30, %32 : vector<16x128xf32>
    %34 = vector.broadcast %8 : f32 to vector<16x128xf32>
    %35 = arith.addf %33, %34 : vector<16x128xf32>
    %cst = arith.constant 5.000000e-01 : f32
    %36 = vector.broadcast %cst : f32 to vector<16x128xf32>
    %37 = arith.mulf %36, %35 : vector<16x128xf32>
    %38 = math.tanh %37 : vector<16x128xf32>
    %cst_6 = arith.constant 5.000000e-01 : f32
    %39 = vector.broadcast %cst_6 : f32 to vector<16x128xf32>
    %40 = arith.mulf %39, %38 : vector<16x128xf32>
    %cst_7 = arith.constant 5.000000e-01 : f32
    %41 = vector.broadcast %cst_7 : f32 to vector<16x128xf32>
    %42 = arith.addf %40, %41 : vector<16x128xf32>
    %c0_8 = arith.constant 0 : index
    %c0_9 = arith.constant 0 : index
    %43 = vector.load %arg3[%c0_8, %c0_9] : memref<16x128xf32, #tpu.memory_space<vmem>>, vector<16x128xf32>
    tpu.vector_store %arg3[%c0_8, %c0_9], %42 {strides = array<i32>} : memref<16x128xf32, #tpu.memory_space<vmem>>, vector<16x128xf32>,
    return
  }
  func.func @transform_0(%arg0: i32) -> i32 {
    %c0_i32 = arith.constant 0 : i32
    %c0_i32_0 = arith.constant 0 : i32
    return %c0_i32 : i32
  }
  func.func @transform_1(%arg0: i32) -> (i32, i32, i32) {
    %c0_i32 = arith.constant 0 : i32
    %c0_i32_0 = arith.constant 0 : i32
    %c0_i32_1 = arith.constant 0 : i32
    return %c0_i32, %arg0, %c0_i32_0 : i32, i32, i32
  }
  func.func @transform_2(%arg0: i32) -> (i32, i32) {
    %c0_i32 = arith.constant 0 : i32
    %c0_i32_0 = arith.constant 0 : i32
    return %arg0, %c0_i32 : i32, i32
  }
}

</mosaic_0001>

<llo_original>
// kernel: tpu_custom_call.1
$region0: #{tpu_custom_call.1}
  #allocation0 [shape = 'u32[]', space=smem, size = 0x4, offset = 0x4, fixed_abs, tag = 'smem constant byte address 0x4 - core index']
  #allocation1 [shape = 'u32[72,128]{1,0:T(1,128)}', space=vmem, size = 0x9000, scoped, tag = 'internal scratch']
  %s0 = inlined_call_operand.hbm [shape: f32[9], index: 0, kind: input, shape index: {}]
  %s1 = inlined_call_operand.hbm [shape: f32[2,16,128], index: 1, kind: input, shape index: {}]
  %s2 = inlined_call_operand.hbm [shape: f32[16,128], index: 2, kind: output, shape index: {}]
  %s3 = sld [smem:[#allocation0]]
  $region26: #{tpu_custom_call.1} parent=0
    _
  %s5 = ssub.s32 1, %s3
  %s6 = scalar_select 0, %s5, %s3
  $region1: #{tpu_custom_call.1} parent=0
    #allocation2 [shape = 'u8[512]{0}', space=smem, size = 0x200, scoped, tag = 'input window, operand 0, single buffered']
    #allocation3 [shape = 's32[1]{0}', space=sflag, size = 0x4, scoped, tag = 'scoped memory for tpu_custom_call.1']
    #allocation4 [shape = 's32[1]{0}', space=sflag, size = 0x4, scoped, tag = 'scoped memory for tpu_custom_call.1']
    #allocation5 [shape = 's32[1]{0}', space=sflag, size = 0x4, scoped, tag = 'scoped memory for tpu_custom_call.1']
    #allocation6 [shape = 'u8[16384]{0}', space=vmem, size = 0x4000, scoped, tag = 'input window, operand 1, single buffered']
    #allocation7 [shape = 'u8[8192]{0}', space=vmem, size = 0x2000, scoped, tag = 'output window, operand 0, single buffered']
    %7 = vsyncpa [#allocation5], 0
    %8 = vsyncpa [#allocation3], 0
    %9 = vsyncpa [#allocation4], 0
    // Predicated region
    $region2: #{tpu_custom_call.1} parent=1 // pred_check
      _
    $region3: #{tpu_custom_call.1} parent=1 // pred_check_branch
      %11 = sbr.rel (0) target = $region5
    $region4: #{tpu_custom_call.1} parent=1 // pred_region
      %13 = vsyncadd [#allocation5], 0
      %s15 = sshll.u32 %s0, 4
      %s16 = int_to_ptr.hbm [resolvable:$true] %s15
      %18 = dma.hbm_to_smem %s16, 16, [#allocation2], [#allocation5]
    $region5: #{tpu_custom_call.1} parent=1 // pred_fallthru
      _
    // Predicated region
    $region6: #{tpu_custom_call.1} parent=1 // pred_check
      _
    $region7: #{tpu_custom_call.1} parent=1 // pred_check_branch
      %20 = sbr.rel (0) target = $region9
    $region8: #{tpu_custom_call.1} parent=1 // pred_region
      %22 = vsyncadd [#allocation3], 0
      %s23 = sshll.u32 %s1, 4
      %s24 = int_to_ptr.hbm [resolvable:$true] %s23
      %s25 = sshll.u32 [#allocation6], 4
      %s26 = int_to_ptr.vmem [resolvable:$true] %s25
      %31 = dma.hbm_to_vmem [thread:$0]  %s24, 512, %s26, [#allocation3], 128, 128, 8
    $region9: #{tpu_custom_call.1} parent=1 // pred_fallthru
      _
    // Predicated region
    $region10: #{tpu_custom_call.1} parent=1 // pred_check
      _
    $region11: #{tpu_custom_call.1} parent=1 // pred_check_branch
      %33 = sbr.rel (0) target = $region13
    $region12: #{tpu_custom_call.1} parent=1 // pred_region
      %35 = dma.done [#allocation5], 16
    $region13: #{tpu_custom_call.1} parent=1 // pred_fallthru
      _
    // Predicated region
    $region14: #{tpu_custom_call.1} parent=1 // pred_check
      _
    $region15: #{tpu_custom_call.1} parent=1 // pred_check_branch
      %37 = sbr.rel (0) target = $region17
    $region16: #{tpu_custom_call.1} parent=1 // pred_region
      %39 = dma.done [#allocation3], 512
    $region17: #{tpu_custom_call.1} parent=1 // pred_fallthru
      _
    %40 = sfence
    %s41 = sld [smem:[#allocation2]]
    %s42 = sld [smem:[#allocation2 + $0x1]]
    %s43 = sld [smem:[#allocation2 + $0x2]]
    %s44 = sld [smem:[#allocation2 + $0x3]]
    %s45 = sld [smem:[#allocation2 + $0x4]]
    %s46 = sld [smem:[#allocation2 + $0x5]]
    %s47 = sld [smem:[#allocation2 + $0x6]]
    %s48 = sld [smem:[#allocation2 + $0x7]]
    %s49 = sld [smem:[#allocation2 + $0x8]]
    %v50 = vld [vmem:[#allocation6] sm:$0xff]
    %v51 = vld [vmem:[#allocation6 + $0x8] sm:$0xff]
    %s52 = scalar_lea.vmem [#allocation6], 16
    %v53 = vld [vmem:[%s52] sm:$0xff]
    %v54 = vld [vmem:[%s52 + $0x8] sm:$0xff]
    %v55 = vstv %s41
    %v56 = vmul.f32 %v55, %v50
    %v57 = vmul.f32 %v55, %v51
    %v58 = vstv %s42
    %v59 = vmul.f32 %v58, %v53
    %v60 = vmul.f32 %v58, %v54
    %v61 = vadd.f32 %v56, %v59
    %v62 = vadd.f32 %v57, %v60
    %v63 = vstv %s45
    %v64 = vadd.f32 %v61, %v63
    %v65 = vadd.f32 %v62, %v63
    %v66 = vtanh.pop %v64
    %v67 = vtanh.pop %v65
    %v68 = vstv %s43
    %v69 = vmul.f32 %v68, %v50
    %v70 = vmul.f32 %v68, %v51
    %v71 = vstv %s44
    %v72 = vmul.f32 %v71, %v53
    %v73 = vmul.f32 %v71, %v54
    %v74 = vadd.f32 %v69, %v72
    %v75 = vadd.f32 %v70, %v73
    %v76 = vstv %s46
    %v77 = vadd.f32 %v74, %v76
    %v78 = vadd.f32 %v75, %v76
    %v79 = vtanh.pop %v77
    %v80 = vtanh.pop %v78
    %v81 = vstv %s47
    %v82 = vmul.f32 %v81, %v66
    %v83 = vmul.f32 %v81, %v67
    %v84 = vstv %s48
    %v85 = vmul.f32 %v84, %v79
    %v86 = vmul.f32 %v84, %v80
    %v87 = vadd.f32 %v82, %v85
    %v88 = vadd.f32 %v83, %v86
    %v89 = vstv %s49
    %v90 = vadd.f32 %v87, %v89
    %v91 = vadd.f32 %v88, %v89
    %v92 = vmul.f32 %v90, 0.5
    %v93 = vmul.f32 %v91, 0.5
    %v94 = vtanh.pop %v92
    %v95 = vtanh.pop %v93
    %v96 = vmul.f32 %v94, 0.5
    %v97 = vmul.f32 %v95, 0.5
    %v98 = vadd.f32 %v96, 0.5
    %v99 = vadd.f32 %v97, 0.5
    %100 = vst [vmem:[#allocation7] sm:$0xff] %v98
    %101 = vst [vmem:[#allocation7 + $0x8] sm:$0xff] %v99
    // Predicated region
    $region18: #{tpu_custom_call.1} parent=1 // pred_check
      _
    $region19: #{tpu_custom_call.1} parent=1 // pred_check_branch
      %103 = sbr.rel (0) target = $region21
    $region20: #{tpu_custom_call.1} parent=1 // pred_region
      %105 = vsyncadd [#allocation4], 0
      %s106 = sshll.u32 [#allocation7], 4
      %s107 = int_to_ptr.vmem [resolvable:$true] %s106
      %s108 = sshll.u32 %s2, 4
      %s109 = int_to_ptr.hbm [resolvable:$true] %s108
      %114 = dma.vmem_to_hbm [thread:$0]  %s107, 256, %s109, [#allocation4], 128, 128, 8
    $region21: #{tpu_custom_call.1} parent=1 // pred_fallthru
      _
    // Predicated region
    $region22: #{tpu_custom_call.1} parent=1 // pred_check
      _
    $region23: #{tpu_custom_call.1} parent=1 // pred_check_branch
      %116 = sbr.rel (0) target = $region25
    $region24: #{tpu_custom_call.1} parent=1 // pred_region
      %118 = dma.done [#allocation4], 256
    $region25: #{tpu_custom_call.1} parent=1 // pred_fallthru
      _
    %119 = vsyncpa [#allocation3], 1
    %120 = vsyncpa [#allocation4], 1
    %121 = vsyncpa [#allocation5], 1

</llo_original>
